<compile_context>
chip_gen: v6e
topology: v6e:2x2x1
jax: 0.10.0
libtpu: 0.0.40
codegen_flags: <defaults>
</compile_context>

<pallas_src>
import functools
import math

import jax
import jax.numpy as jnp
from jax.experimental import pallas as pl
from jax.experimental.pallas import tpu as pltpu

LN_EPS = 1e-5            # RobertaModel layer_norm_eps
PAD_TOKEN_ID = 1         # Roberta padding idx
ROW_TILE_TARGET = 256    # token rows per grid step (MXU / HBM-roofline friendly)
VMEM_LIMIT_BYTES = 48 * 1024 * 1024   # <= 56 MiB so it also fits v7x (64 MiB)

_SQRT1_2 = 0.7071067811865476


def _pick_tile(dim, target, align):
    """Largest tile <= target that divides dim and is a multiple of align;
    falls back to the full dim (always legal as a block shape)."""
    if dim <= target:
        return dim
    t = (target // align) * align
    while t >= align:
        if dim % t == 0:
            return t
        t -= align
    return dim


def _erf_approx(x):
    """erf via Abramowitz & Stegun 7.1.26 (|abs err| < 1.5e-7).

    Uses only exp / mul / add / select so it lowers cleanly on the VPU/EUP
    (exact-GELU parity with HF Roberta to ~f32 rounding)."""
    a1, a2, a3, a4, a5 = (0.254829592, -0.284496736, 1.421413741,
                          -1.453152027, 1.061405429)
    p = 0.3275911
    ax = jnp.abs(x)
    t = pl.reciprocal(1.0 + p * ax, approx=False)
    poly = ((((a5 * t + a4) * t + a3) * t + a2) * t + a1) * t
    y = 1.0 - poly * jnp.exp(-(ax * ax))
    return jnp.where(x < 0.0, -y, y)


def _gelu_erf(x):
    return 0.5 * x * (1.0 + _erf_approx(x * _SQRT1_2))


# ----------------------------- Pallas kernels ------------------------------

def _linear_kernel(x_ref, w_ref, b_ref, o_ref, *, activation):
    x = x_ref[...].astype(jnp.bfloat16)              # bf16 MXU, f32 accumulate
    y = jnp.dot(x, w_ref[...], preferred_element_type=jnp.float32) + b_ref[...]
    if activation == "gelu":
        y = _gelu_erf(y)
    o_ref[...] = y.astype(o_ref.dtype)


def linear(x, w, b, activation=None, out_dtype=None):
    """x: (M, K), w: (K, N) bf16, b: (1, N) f32 -> (M, N) out_dtype.

    The weight/bias blocks have constant index maps, so they are fetched from
    HBM once and stay VMEM-resident across the row-tile grid (no re-streaming).
    """
    M, K = x.shape
    _, N = w.shape
    tm = _pick_tile(M, ROW_TILE_TARGET, 8)
    out_dtype = out_dtype or x.dtype
    return pl.pallas_call(
        functools.partial(_linear_kernel, activation=activation),
        out_shape=jax.ShapeDtypeStruct((M, N), out_dtype),
        grid_spec=pltpu.PrefetchScalarGridSpec(
            num_scalar_prefetch=0,
            grid=(M // tm,),
            in_specs=[
                pl.BlockSpec((tm, K), lambda i: (i, 0)),
                pl.BlockSpec((K, N), lambda i: (0, 0)),   # resident weight
                pl.BlockSpec((1, N), lambda i: (0, 0)),
            ],
            out_specs=pl.BlockSpec((tm, N), lambda i: (i, 0)),
        ),
        compiler_params=pltpu.CompilerParams(
            dimension_semantics=("parallel",),
            vmem_limit_bytes=VMEM_LIMIT_BYTES),
    )(x, w, b)


def _linear_add_ln_kernel(x_ref, w_ref, b_ref, r_ref, g_ref, bt_ref, o_ref, *, eps):
    x = x_ref[...].astype(jnp.bfloat16)              # bf16 MXU, f32 accumulate
    y = jnp.dot(x, w_ref[...], preferred_element_type=jnp.float32) + b_ref[...]
    y = y + r_ref[...].astype(jnp.float32)           # residual add (fused)
    mean = jnp.mean(y, axis=-1, keepdims=True)
    yc = y - mean
    var = jnp.mean(yc * yc, axis=-1, keepdims=True)
    z = yc * jax.lax.rsqrt(var + eps)
    o_ref[...] = (z * g_ref[...] + bt_ref[...]).astype(o_ref.dtype)


def linear_add_layernorm(x, w, b, residual, gamma, beta, eps=LN_EPS):
    """LayerNorm(x @ w + b + residual); x: (M, K) (f32 or bf16), w: (K, N) bf16."""
    M, K = x.shape
    _, N = w.shape
    tm = _pick_tile(M, ROW_TILE_TARGET, 8)
    return pl.pallas_call(
        functools.partial(_linear_add_ln_kernel, eps=eps),
        out_shape=jax.ShapeDtypeStruct((M, N), residual.dtype),
        grid_spec=pltpu.PrefetchScalarGridSpec(
            num_scalar_prefetch=0,
            grid=(M // tm,),
            in_specs=[
                pl.BlockSpec((tm, K), lambda i: (i, 0)),
                pl.BlockSpec((K, N), lambda i: (0, 0)),   # resident weight
                pl.BlockSpec((1, N), lambda i: (0, 0)),
                pl.BlockSpec((tm, N), lambda i: (i, 0)),
                pl.BlockSpec((1, N), lambda i: (0, 0)),
                pl.BlockSpec((1, N), lambda i: (0, 0)),
            ],
            out_specs=pl.BlockSpec((tm, N), lambda i: (i, 0)),
        ),
        compiler_params=pltpu.CompilerParams(
            dimension_semantics=("parallel",),
            vmem_limit_bytes=VMEM_LIMIT_BYTES),
    )(x, w, b, residual, gamma, beta)


def _ln_kernel(x_ref, g_ref, b_ref, o_ref, *, eps):
    x = x_ref[...].astype(jnp.float32)
    mean = jnp.mean(x, axis=-1, keepdims=True)
    xc = x - mean
    var = jnp.mean(xc * xc, axis=-1, keepdims=True)
    y = xc * jax.lax.rsqrt(var + eps)
    o_ref[...] = (y * g_ref[...] + b_ref[...]).astype(o_ref.dtype)


def layernorm(x, gamma, beta, eps=LN_EPS):
    """LayerNorm over the last dim; x: (M, H)."""
    M, H = x.shape
    tm = _pick_tile(M, ROW_TILE_TARGET, 8)
    return pl.pallas_call(
        functools.partial(_ln_kernel, eps=eps),
        out_shape=jax.ShapeDtypeStruct((M, H), x.dtype),
        grid_spec=pltpu.PrefetchScalarGridSpec(
            num_scalar_prefetch=0,
            grid=(M // tm,),
            in_specs=[
                pl.BlockSpec((tm, H), lambda i: (i, 0)),
                pl.BlockSpec((1, H), lambda i: (0, 0)),
                pl.BlockSpec((1, H), lambda i: (0, 0)),
            ],
            out_specs=pl.BlockSpec((tm, H), lambda i: (i, 0)),
        ),
        compiler_params=pltpu.CompilerParams(
            dimension_semantics=("parallel",),
            vmem_limit_bytes=VMEM_LIMIT_BYTES),
    )(x, gamma, beta)


def _attention_kernel(qkv_ref, wo_ref, mask_ref, res_ref, bo_ref, g_ref, bt_ref,
                      o_ref, acc_ref, *, num_heads, head_dim, scale, eps):
    """Per-batch attention with the output projection, bias, residual add and
    LayerNorm fused in.  Per-head (S, dh) views are loaded straight from the
    refs (no (S, 3H) slab, no end-of-kernel concat); each head's context is
    projected through its Wo slice and MXU-accumulated into the (S, H) f32
    scratch, so nothing lane-misaligned is ever stored."""
    H = num_heads * head_dim
    add_mask = mask_ref[0]                      # (1, S) additive float mask

    for h in range(num_heads):                  # static unroll; per-head temps
        lo = h * head_dim                       # die at the scratch store below
        q = (qkv_ref[0, :, lo:lo + head_dim].astype(jnp.float32)
             * scale).astype(jnp.bfloat16)      # fold 1/sqrt(dh) into q
        k = qkv_ref[0, :, H + lo:H + lo + head_dim]          # (S, dh) bf16
        v = qkv_ref[0, :, 2 * H + lo:2 * H + lo + head_dim]  # (S, dh) bf16

        # scores without an explicit K transpose: contract the dh dims
        s = jax.lax.dot_general(q, k, (((1,), (1,)), ((), ())),
                                preferred_element_type=jnp.float32)   # (S, S)
        s = s + add_mask
        mx = jnp.max(s, axis=-1, keepdims=True)
        p = jnp.exp(s - mx)
        inv = pl.reciprocal(jnp.sum(p, axis=-1, keepdims=True), approx=False)
        ctx = jnp.dot((p * inv).astype(jnp.bfloat16), v,
                      preferred_element_type=jnp.float32)             # (S, dh)

        # fused output projection: ctx_h @ Wo[h*dh:(h+1)*dh, :], f32 accumulate
        contrib = jnp.dot(ctx.astype(jnp.bfloat16),
                          wo_ref[lo:lo + head_dim, :],
                          preferred_element_type=jnp.float32)         # (S, H)
        if h == 0:
            acc_ref[...] = contrib
        else:
            acc_ref[...] += contrib

    # epilogue: bias + residual + LayerNorm (one lane-dense (S, H) store)
    y = acc_ref[...] + bo_ref[...] + res_ref[0].astype(jnp.float32)
    mean = jnp.mean(y, axis=-1, keepdims=True)
    yc = y - mean
    var = jnp.mean(yc * yc, axis=-1, keepdims=True)
    z = yc * jax.lax.rsqrt(var + eps)
    o_ref[0] = (z * g_ref[...] + bt_ref[...]).astype(o_ref.dtype)


def attention_block(qkv, wo, bo, add_mask, residual, gamma, beta,
                    num_heads, head_dim, eps=LN_EPS):
    """qkv: (B, S, 3H) bf16 (fused QKV), wo: (H, H) bf16, bo/gamma/beta: (1, H),
    add_mask: (B, 1, S) f32, residual: (B, S, H) f32 ->
    LayerNorm(attn(qkv) @ wo + bo + residual): (B, S, H) f32."""
    B, S, threeH = qkv.shape
    H = num_heads * head_dim
    scale = 1.0 / math.sqrt(head_dim)
    return pl.pallas_call(
        functools.partial(_attention_kernel, num_heads=num_heads,
                          head_dim=head_dim, scale=scale, eps=eps),
        out_shape=jax.ShapeDtypeStruct((B, S, H), residual.dtype),
        grid_spec=pltpu.PrefetchScalarGridSpec(
            num_scalar_prefetch=0,
            grid=(B,),
            in_specs=[
                pl.BlockSpec((1, S, threeH), lambda b: (b, 0, 0)),
                pl.BlockSpec((H, H), lambda b: (0, 0)),     # resident Wo
                pl.BlockSpec((1, 1, S), lambda b: (b, 0, 0)),
                pl.BlockSpec((1, S, H), lambda b: (b, 0, 0)),
                pl.BlockSpec((1, H), lambda b: (0, 0)),
                pl.BlockSpec((1, H), lambda b: (0, 0)),
                pl.BlockSpec((1, H), lambda b: (0, 0)),
            ],
            out_specs=pl.BlockSpec((1, S, H), lambda b: (b, 0, 0)),
            scratch_shapes=[pltpu.VMEM((S, H), jnp.float32)],
        ),
        compiler_params=pltpu.CompilerParams(
            dimension_semantics=("parallel",),
            vmem_limit_bytes=VMEM_LIMIT_BYTES),
    )(qkv, wo, add_mask, residual, bo, gamma, beta)


# --------------------------- parameter creation -----------------------------

def init_params(key, cfg):
    H, L, I = cfg["hidden"], cfg["layers"], cfg["inter"]
    V, P = cfg["vocab"], cfg["max_pos"]

    def dense(k, din, dout):
        w = (jax.random.normal(k, (din, dout), jnp.float32) * 0.02).astype(jnp.bfloat16)
        return w, jnp.zeros((1, dout), jnp.float32)

    keys = jax.random.split(key, 3 + L)
    params = {
        "word_emb": jax.random.normal(keys[0], (V, H), jnp.float32) * 0.02,
        "pos_emb": jax.random.normal(keys[1], (P, H), jnp.float32) * 0.02,
        "type_emb": jax.random.normal(keys[2], (2, H), jnp.float32) * 0.02,
        "emb_ln_g": jnp.ones((1, H), jnp.float32),
        "emb_ln_b": jnp.zeros((1, H), jnp.float32),
        "layers": [],
    }
    for l in range(L):
        lk = jax.random.split(keys[3 + l], 6)
        wq, bq = dense(lk[0], H, H)
        wk, bk = dense(lk[1], H, H)
        wv, bv = dense(lk[2], H, H)
        wqkv = jnp.concatenate([wq, wk, wv], axis=1)   # fused (H, 3H) bf16
        bqkv = jnp.concatenate([bq, bk, bv], axis=1)   # fused (1, 3H) f32
        wo, bo = dense(lk[3], H, H)
        wi, bi = dense(lk[4], H, I)
        wd, bd = dense(lk[5], I, H)
        params["layers"].append(dict(
            wqkv=wqkv, bqkv=bqkv, wo=wo, bo=bo,
            attn_ln_g=jnp.ones((1, H), jnp.float32),
            attn_ln_b=jnp.zeros((1, H), jnp.float32),
            wi=wi, bi=bi, wd=wd, bd=bd,
            out_ln_g=jnp.ones((1, H), jnp.float32),
            out_ln_b=jnp.zeros((1, H), jnp.float32),
        ))
    return params


# ------------------------------ forward pass --------------------------------

def roberta_language_backbone(params, cfg, input_ids, attention_mask):
    """Mirror of RobertaLanguageBackbone.forward.

    Returns (hidden_states_tuple, key_padding_mask) where hidden_states_tuple
    holds the last `num_text_output_layers` hidden states (each (B, S, H) f32)
    and key_padding_mask = attention_mask.ne(1) (bool, (B, S))."""
    B, S = input_ids.shape
    H, nh = cfg["hidden"], cfg["heads"]
    dh = H // nh

    # --- embeddings (gathers = glue) ---
    tok_mask = (input_ids != PAD_TOKEN_ID).astype(jnp.int32)
    position_ids = jnp.cumsum(tok_mask, axis=1) * tok_mask + PAD_TOKEN_ID
    emb = (params["word_emb"][input_ids]
           + params["pos_emb"][position_ids]
           + params["type_emb"][jnp.zeros_like(input_ids)])
    x = emb.reshape(B * S, H).astype(jnp.float32)
    h = layernorm(x, params["emb_ln_g"], params["emb_ln_b"])

    hidden_states = [h.reshape(B, S, H)]

    # HF extended attention mask, kept at (B, 1, S) -- never replicated per head.
    add_mask = ((1.0 - attention_mask.astype(jnp.float32)) * -1e9).reshape(B, 1, S)

    for lyr in params["layers"]:
        # fused QKV projection -> (B*S, 3H), stored bf16 (halves HBM traffic)
        qkv = linear(h, lyr["wqkv"], lyr["bqkv"], out_dtype=jnp.bfloat16)
        # per-batch attention fused with Wo, bias, residual add and LayerNorm
        # (the per-head context never round-trips through HBM); the
        # (B*S, *) <-> (B, S, *) reshapes are contiguous / metadata-only.
        h = attention_block(qkv.reshape(B, S, 3 * H), lyr["wo"], lyr["bo"],
                            add_mask, h.reshape(B, S, H),
                            lyr["attn_ln_g"], lyr["attn_ln_b"],
                            nh, dh).reshape(B * S, H)
        # feed-forward: GELU up-projection (bf16 intermediate in HBM),
        # down-projection fused with residual add + LayerNorm
        inter = linear(h, lyr["wi"], lyr["bi"], activation="gelu",
                       out_dtype=jnp.bfloat16)
        h = linear_add_layernorm(inter, lyr["wd"], lyr["bd"],
                                 h, lyr["out_ln_g"], lyr["out_ln_b"])

        hidden_states.append(h.reshape(B, S, H))

    out_hidden = tuple(hidden_states[-cfg["num_text_output_layers"]:])
    key_padding_mask = attention_mask != 1          # .ne(1).bool()
    return out_hidden, key_padding_mask


# ----------------------------------- main ------------------------------------

if __name__ == "__main__":
    cfg = dict(
        vocab=100,
        max_pos=16,
        hidden=32,
        heads=4,
        layers=2,
        inter=64,
        num_text_output_layers=2,
    )
    B, S = 2, 8

    key = jax.random.PRNGKey(0)
    k_params, k_ids = jax.random.split(key)
    params = init_params(k_params, cfg)

    input_ids = jax.random.randint(k_ids, (B, S), 2, cfg["vocab"], dtype=jnp.int32)
    # pad out the last two tokens of the second sequence
    input_ids = input_ids.at[1, -2:].set(PAD_TOKEN_ID)
    attention_mask = jnp.ones((B, S), dtype=jnp.int32).at[1, -2:].set(0)

    hidden_states, pad_mask = roberta_language_backbone(
        params, cfg, input_ids, attention_mask)
    jax.block_until_ready((hidden_states, pad_mask))

    assert len(hidden_states) == cfg["num_text_output_layers"]
    assert hidden_states[-1].shape == (B, S, cfg["hidden"])
    assert hidden_states[-1].dtype == jnp.float32
    assert pad_mask.dtype == jnp.bool_ and pad_mask.shape == (B, S)
    print("KERNEL_OK")
</pallas_src>

<mosaic_0001>
module attributes {stable_mosaic.version = 11 : i64} {
  func.func @_ln_kernel(%arg0: i32, %arg1: memref<16x32xf32, #tpu.memory_space<vmem>>, %arg2: memref<1x32xf32, #tpu.memory_space<vmem>>, %arg3: memref<1x32xf32, #tpu.memory_space<vmem>>, %arg4: memref<16x32xf32, #tpu.memory_space<vmem>>) attributes {dimension_semantics = [#tpu.dimension_semantics<parallel>], iteration_bounds = array<i64: 1>, scalar_prefetch = 0 : i64, scratch_operands = 0 : i64, tpu.core_type = #tpu.core_type<tc>, window_params = [{transform_indices = @transform_0, window_bounds = array<i64: 16, 32>}, {pipeline_mode = #tpu.pipeline_mode<synchronous>, transform_indices = @transform_1, window_bounds = array<i64: 1, 32>}, {pipeline_mode = #tpu.pipeline_mode<synchronous>, transform_indices = @transform_2, window_bounds = array<i64: 1, 32>}, {transform_indices = @transform_3, window_bounds = array<i64: 16, 32>}]} {
    %c0 = arith.constant 0 : index
    %c0_0 = arith.constant 0 : index
    %0 = vector.load %arg1[%c0, %c0_0] : memref<16x32xf32, #tpu.memory_space<vmem>>, vector<16x32xf32>
    %cst = arith.constant dense<0.000000e+00> : vector<16xf32>
    %1 = vector.multi_reduction <add>, %0, %cst [1] : vector<16x32xf32> to vector<16xf32>
    %2 = vector.shape_cast %1 : vector<16xf32> to vector<16x1xf32>
    %cst_1 = arith.constant 3.200000e+01 : f32
    %3 = vector.broadcast %cst_1 : f32 to vector<16x1xf32>
    %4 = arith.divf %2, %3 : vector<16x1xf32>
    %5 = vector.broadcast %4 : vector<16x1xf32> to vector<16x32xf32>
    %6 = arith.subf %0, %5 : vector<16x32xf32>
    %7 = arith.mulf %6, %6 : vector<16x32xf32>
    %cst_2 = arith.constant dense<0.000000e+00> : vector<16xf32>
    %8 = vector.multi_reduction <add>, %7, %cst_2 [1] : vector<16x32xf32> to vector<16xf32>
    %9 = vector.shape_cast %8 : vector<16xf32> to vector<16x1xf32>
    %cst_3 = arith.constant 3.200000e+01 : f32
    %10 = vector.broadcast %cst_3 : f32 to vector<16x1xf32>
    %11 = arith.divf %9, %10 : vector<16x1xf32>
    %cst_4 = arith.constant 9.99999974E-6 : f32
    %12 = vector.broadcast %cst_4 : f32 to vector<16x1xf32>
    %13 = arith.addf %11, %12 : vector<16x1xf32>
    %14 = math.rsqrt %13 : vector<16x1xf32>
    %15 = vector.broadcast %14 : vector<16x1xf32> to vector<16x32xf32>
    %16 = arith.mulf %6, %15 : vector<16x32xf32>
    %c0_5 = arith.constant 0 : index
    %c0_6 = arith.constant 0 : index
    %17 = vector.load %arg2[%c0_5, %c0_6] : memref<1x32xf32, #tpu.memory_space<vmem>>, vector<1x32xf32>
    %18 = vector.broadcast %17 : vector<1x32xf32> to vector<16x32xf32>
    %19 = arith.mulf %16, %18 : vector<16x32xf32>
    %c0_7 = arith.constant 0 : index
    %c0_8 = arith.constant 0 : index
    %20 = vector.load %arg3[%c0_7, %c0_8] : memref<1x32xf32, #tpu.memory_space<vmem>>, vector<1x32xf32>
    %21 = vector.broadcast %20 : vector<1x32xf32> to vector<16x32xf32>
    %22 = arith.addf %19, %21 : vector<16x32xf32>
    %c0_9 = arith.constant 0 : index
    %c0_10 = arith.constant 0 : index
    %23 = vector.load %arg4[%c0_9, %c0_10] : memref<16x32xf32, #tpu.memory_space<vmem>>, vector<16x32xf32>
    tpu.vector_store %arg4[%c0_9, %c0_10], %22 {strides = array<i32>} : memref<16x32xf32, #tpu.memory_space<vmem>>, vector<16x32xf32>,
    return
  }
  func.func @transform_0(%arg0: i32) -> (i32, i32) {
    %c0_i32 = arith.constant 0 : i32
    %c0_i32_0 = arith.constant 0 : i32
    return %arg0, %c0_i32 : i32, i32
  }
  func.func @transform_1(%arg0: i32) -> (i32, i32) {
    %c0_i32 = arith.constant 0 : i32
    %c0_i32_0 = arith.constant 0 : i32
    %c0_i32_1 = arith.constant 0 : i32
    return %c0_i32, %c0_i32_0 : i32, i32
  }
  func.func @transform_2(%arg0: i32) -> (i32, i32) {
    %c0_i32 = arith.constant 0 : i32
    %c0_i32_0 = arith.constant 0 : i32
    %c0_i32_1 = arith.constant 0 : i32
    return %c0_i32, %c0_i32_0 : i32, i32
  }
  func.func @transform_3(%arg0: i32) -> (i32, i32) {
    %c0_i32 = arith.constant 0 : i32
    %c0_i32_0 = arith.constant 0 : i32
    return %arg0, %c0_i32 : i32, i32
  }
}

</mosaic_0001>

<llo_original>
// kernel: tpu_custom_call.1
$region0: #{tpu_custom_call.1}
  #allocation0 [shape = 'u32[]', space=smem, size = 0x4, offset = 0x4, fixed_abs, tag = 'smem constant byte address 0x4 - core index']
  #allocation1 [shape = 'u32[144,128]{1,0:T(1,128)}', space=vmem, size = 0x12000, scoped, tag = 'internal scratch']
  %s0 = inlined_call_operand.hbm [shape: f32[16,32], index: 0, kind: input, shape index: {}]
  %s1 = inlined_call_operand.vmem [shape: f32[1,32], index: 1, kind: input, shape index: {}]
  %s2 = inlined_call_operand.vmem [shape: f32[1,32], index: 2, kind: input, shape index: {}]
  %s3 = inlined_call_operand.hbm [shape: f32[16,32], index: 3, kind: output, shape index: {}]
  %s4 = sld [smem:[#allocation0]]
  $region26: #{tpu_custom_call.1} parent=0
    _
  %s6 = ssub.s32 1, %s4
  %s7 = scalar_select 0, %s6, %s4
  $region1: #{tpu_custom_call.1} parent=0
    #allocation2 [shape = 'u8[8192]{0}', space=vmem, size = 0x2000, scoped, tag = 'input window, operand 0, single buffered']
    #allocation3 [shape = 's32[1]{0}', space=sflag, size = 0x4, scoped, tag = 'scoped memory for tpu_custom_call.1']
    #allocation4 [shape = 's32[1]{0}', space=sflag, size = 0x4, scoped, tag = 'scoped memory for tpu_custom_call.1']
    #allocation5 [shape = 'u8[8192]{0}', space=vmem, size = 0x2000, scoped, tag = 'output window, operand 0, single buffered']
    %8 = vsyncpa [#allocation3], 0
    %9 = vsyncpa [#allocation4], 0
    // Predicated region
    $region2: #{tpu_custom_call.1} parent=1 // pred_check
      _
    $region3: #{tpu_custom_call.1} parent=1 // pred_check_branch
      %11 = sbr.rel (0) target = $region5
    $region4: #{tpu_custom_call.1} parent=1 // pred_region
      %s13 = ssub.s32 256, 256
      %14 = vsyncadd [#allocation3], %s13
      %s15 = sshll.u32 [#allocation2], 4
      %s16 = int_to_ptr.vmem [resolvable:$true] %s15
      %21 = dma.hbm_to_vmem [thread:$0]  %s0, 256, %s16, [#allocation3], 128, 128, 8
    $region5: #{tpu_custom_call.1} parent=1 // pred_fallthru
      _
    // Predicated region
    $region6: #{tpu_custom_call.1} parent=1 // pred_check
      _
    $region7: #{tpu_custom_call.1} parent=1 // pred_check_branch
      %23 = sbr.rel (0) target = $region9
    $region8: #{tpu_custom_call.1} parent=1 // pred_region
      _
    $region9: #{tpu_custom_call.1} parent=1 // pred_fallthru
      _
    // Predicated region
    $region10: #{tpu_custom_call.1} parent=1 // pred_check
      _
    $region11: #{tpu_custom_call.1} parent=1 // pred_check_branch
      %25 = sbr.rel (0) target = $region13
    $region12: #{tpu_custom_call.1} parent=1 // pred_region
      _
    $region13: #{tpu_custom_call.1} parent=1 // pred_fallthru
      _
    // Predicated region
    $region14: #{tpu_custom_call.1} parent=1 // pred_check
      _
    $region15: #{tpu_custom_call.1} parent=1 // pred_check_branch
      %27 = sbr.rel (0) target = $region17
    $region16: #{tpu_custom_call.1} parent=1 // pred_region
      %28 = dma.done [#allocation3], 256
    $region17: #{tpu_custom_call.1} parent=1 // pred_fallthru
      _
    %v29 = vld [vmem:[#allocation2] sm:$0xff]
    %v30 = vld [vmem:[#allocation2 + $0x8] sm:$0xff]
    %vm31 = vcmask 261120
    %v32 = vsel %vm31, %v29, 0.0
    %33 = vadd.xlane.f32.xlu0 %v32
    %v34 = vpop.xlane.xlu0 %33
    %v35 = vsel %vm31, %v30, 0.0
    %36 = vadd.xlane.f32.xlu0 %v35
    %v37 = vpop.xlane.xlu0 %36
    %v38 = vrcp.pop 32.0
    %v39 = vmul.f32 %v34, %v38
    %v40 = vmul.f32 %v37, %v38
    %v41 = vsub.f32 %v29, %v39
    %v42 = vsub.f32 %v30, %v40
    %v43 = vmul.f32 %v41, %v41
    %v44 = vmul.f32 %v42, %v42
    %v45 = vsel %vm31, %v43, 0.0
    %46 = vadd.xlane.f32.xlu0 %v45
    %v47 = vpop.xlane.xlu0 %46
    %v48 = vsel %vm31, %v44, 0.0
    %49 = vadd.xlane.f32.xlu0 %v48
    %v50 = vpop.xlane.xlu0 %49
    %v51 = vmul.f32 %v47, %v38
    %v52 = vmul.f32 %v50, %v38
    %v53 = vadd.f32 %v51, 1e-05
    %v54 = vadd.f32 %v52, 1e-05
    %v55 = vrsqrt.pop %v53
    %v56 = vrsqrt.pop %v54
    %v57 = vmul.f32 %v41, %v55
    %v58 = vmul.f32 %v42, %v56
    %v59 = vld [vmem:[%s1] sm:$0x1]
    %v61 = vlaneseq
    %v62 = vshrl.u32 %v61, 7
    %v63 = vsub.s32 0, %v62
    %v64 = vrot.slane %v59, %v63
    %v66 = vmul.f32 %v57, %v64
    %v67 = vmul.f32 %v58, %v64
    %v68 = vld [vmem:[%s2] sm:$0x1]
    %v70 = vlaneseq
    %v71 = vshrl.u32 %v70, 7
    %v72 = vsub.s32 0, %v71
    %v73 = vrot.slane %v68, %v72
    %v75 = vadd.f32 %v66, %v73
    %v76 = vadd.f32 %v67, %v73
    %77 = vst.msk [vmem:[#allocation5] sm:$0xff] %vm31, %v75
    %78 = vst.msk [vmem:[#allocation5 + $0x8] sm:$0xff] %vm31, %v76
    // Predicated region
    $region18: #{tpu_custom_call.1} parent=1 // pred_check
      _
    $region19: #{tpu_custom_call.1} parent=1 // pred_check_branch
      %80 = sbr.rel (0) target = $region21
    $region20: #{tpu_custom_call.1} parent=1 // pred_region
      %s82 = ssub.s32 256, 256
      %83 = vsyncadd [#allocation4], %s82
      %s84 = sshll.u32 [#allocation5], 4
      %s85 = int_to_ptr.vmem [resolvable:$true] %s84
      %90 = dma.vmem_to_hbm [thread:$0]  %s85, 256, %s3, [#allocation4], 128, 128, 8
    $region21: #{tpu_custom_call.1} parent=1 // pred_fallthru
      _
    // Predicated region
    $region22: #{tpu_custom_call.1} parent=1 // pred_check
      _
    $region23: #{tpu_custom_call.1} parent=1 // pred_check_branch
      %92 = sbr.rel (0) target = $region25
    $region24: #{tpu_custom_call.1} parent=1 // pred_region
      %93 = dma.done [#allocation4], 256
    $region25: #{tpu_custom_call.1} parent=1 // pred_fallthru
      _
    %94 = vsyncpa [#allocation3], 1
    %95 = vsyncpa [#allocation4], 1

</llo_original>
